<compile_context>
chip_gen: v5e
topology: v5e:2x2
jax: 0.10.0
libtpu: 0.0.40
codegen_flags: <defaults>
</compile_context>

<pallas_src>
import functools

import jax
import jax.numpy as jnp
from jax.experimental import pallas as pl
from jax.experimental.pallas import tpu as pltpu


def _round_up(v, m):
    return (v + m - 1) // m * m


# ---------------------------------------------------------------------------
# Kernels.  "_concat" variants build the whole padded tile in registers and
# emit ONE lane-dense store; "_multistore" variants are the robust fallback
# (masked strip stores) selected only if the concat probe fails.
# ---------------------------------------------------------------------------
def _pad3d_concat_kernel(x_ref, o_ref, *, h_top, h_bottom, w_left, w_right, value):
    # x_ref: (cb, H, W) -> o_ref: (cb, H_out, W_out); single store from lane 0.
    x = x_ref[...]
    cb, H, W = x.shape
    dt = o_ref.dtype
    W_out = W + w_left + w_right

    parts = []
    if w_left:
        parts.append(jnp.full((cb, H, w_left), value, dt))
    parts.append(x)
    if w_right:
        parts.append(jnp.full((cb, H, w_right), value, dt))
    y = parts[0] if len(parts) == 1 else jnp.concatenate(parts, axis=2)

    parts = []
    if h_top:
        parts.append(jnp.full((cb, h_top, W_out), value, dt))
    parts.append(y)
    if h_bottom:
        parts.append(jnp.full((cb, h_bottom, W_out), value, dt))
    o_ref[...] = parts[0] if len(parts) == 1 else jnp.concatenate(parts, axis=1)


def _pad3d_multistore_kernel(x_ref, o_ref, *, h_top, h_bottom, w_left, w_right, value):
    cb, H, W = x_ref.shape
    W_out = o_ref.shape[2]
    dt = o_ref.dtype
    if h_top:
        o_ref[:, :h_top, :] = jnp.full((cb, h_top, W_out), value, dt)
    if h_bottom:
        o_ref[:, h_top + H:, :] = jnp.full((cb, h_bottom, W_out), value, dt)
    if w_left:
        o_ref[:, h_top:h_top + H, :w_left] = jnp.full((cb, H, w_left), value, dt)
    if w_right:
        o_ref[:, h_top:h_top + H, w_left + W:] = jnp.full((cb, H, w_right), value, dt)
    o_ref[:, h_top:h_top + H, w_left:w_left + W] = x_ref[...]


def _padflat_concat_kernel(x_ref, o_ref, *, pad_lo, pad_hi, value):
    # H-only padding flattened onto the lane axis: (cb, H*W) -> (cb, H_out*W).
    x = x_ref[...]
    cb = x.shape[0]
    dt = o_ref.dtype
    parts = []
    if pad_lo:
        parts.append(jnp.full((cb, pad_lo), value, dt))
    parts.append(x)
    if pad_hi:
        parts.append(jnp.full((cb, pad_hi), value, dt))
    o_ref[...] = parts[0] if len(parts) == 1 else jnp.concatenate(parts, axis=1)


def _padflat_multistore_kernel(x_ref, o_ref, *, pad_lo, pad_hi, value):
    cb, L = x_ref.shape
    dt = o_ref.dtype
    if pad_lo:
        o_ref[:, :pad_lo] = jnp.full((cb, pad_lo), value, dt)
    if pad_hi:
        o_ref[:, pad_lo + L:] = jnp.full((cb, pad_hi), value, dt)
    o_ref[:, pad_lo:pad_lo + L] = x_ref[...]


@functools.lru_cache(maxsize=1)
def _unaligned_concat_supported():
    """One-time probe: can Mosaic lower unaligned lane/sublane concatenation?"""
    def probe(x_ref, o_ref):
        x = x_ref[...]                                              # (2, 5, 9)
        y = jnp.concatenate(
            [jnp.full((2, 5, 3), 1.0, jnp.float32), x,
             jnp.full((2, 5, 2), 2.0, jnp.float32)], axis=2)        # (2, 5, 14)
        o_ref[...] = jnp.concatenate(
            [y, jnp.full((2, 3, 14), 3.0, jnp.float32)], axis=1)    # (2, 8, 14)

    try:
        x = jnp.arange(2 * 5 * 9, dtype=jnp.float32).reshape(2, 5, 9)
        out = pl.pallas_call(
            probe, out_shape=jax.ShapeDtypeStruct((2, 8, 14), jnp.float32))(x)
        out = jax.block_until_ready(out)
        ref = jnp.concatenate(
            [jnp.concatenate(
                [jnp.full((2, 5, 3), 1.0, jnp.float32), x,
                 jnp.full((2, 5, 2), 2.0, jnp.float32)], axis=2),
             jnp.full((2, 3, 14), 3.0, jnp.float32)], axis=1)
        return bool(jnp.array_equal(out, ref))
    except Exception:
        return False


def _tpu_params():
    """Returns (tile_budget_bytes per buffer set, vmem_limit_bytes, num_tensorcores)."""
    vmem_cap = 0
    try:
        vmem_cap = int(pltpu.get_tpu_info().vmem_capacity_bytes)
    except Exception:
        pass
    kind = ""
    try:
        kind = jax.devices()[0].device_kind.lower()
    except Exception:
        pass
    if "v7" in kind or (0 < vmem_cap <= (64 << 20)):
        # v7x: 64 MiB physical VMEM per TensorCore, 2 TensorCores per chip.
        return 12 << 20, 32 << 20, 2
    if vmem_cap >= (96 << 20) or "v5" in kind or "v6" in kind:
        # v5e/v6e: 128 MiB VMEM, single TensorCore -> bigger tiles, fewer steps.
        return 24 << 20, 64 << 20, 1
    # Unknown part: conservative sizing, assume a single TensorCore.
    return 12 << 20, 32 << 20, 1


def padding_layer(x, padding, mode="constant", value=0.0, *, min_pallas_bytes=1 << 20):
    """Pallas equivalent of PaddingLayer(padding, mode)(x) for 4-D NCHW inputs.

    `padding` follows torch.nn.functional.pad (last dim first):
        (w_left, w_right) or (w_left, w_right, h_top, h_bottom).
    Negative entries crop (torch semantics) and are applied as an XLA slice.
    Tensors smaller than `min_pallas_bytes` use jnp.pad (XLA fuses it and wins
    on tiny shapes).
    """
    if mode != "constant":
        # TODO(synk): 'reflect'/'replicate'/'circular' need cross-lane gathers;
        # only constant padding is implemented here.
        raise NotImplementedError(f"mode={mode!r} not supported in this kernel")
    if x.ndim != 4:
        raise NotImplementedError("only 4-D NCHW inputs are supported")

    pads = tuple(int(p) for p in padding)
    if len(pads) == 2:
        pads = pads + (0, 0)
    if len(pads) != 4:
        raise NotImplementedError("padding must have length 2 or 4 for NCHW")
    w_left, w_right, h_top, h_bottom = pads

    if jnp.issubdtype(x.dtype, jnp.integer) and float(value) != int(value):
        raise ValueError("non-integral constant pad value for an integer tensor")

    # Negative padding == cropping (torch semantics).
    crop_t, crop_b = max(0, -h_top), max(0, -h_bottom)
    crop_l, crop_r = max(0, -w_left), max(0, -w_right)
    if crop_t or crop_b or crop_l or crop_r:
        x = x[:, :, crop_t: x.shape[2] - crop_b, crop_l: x.shape[3] - crop_r]
    h_top, h_bottom = max(0, h_top), max(0, h_bottom)
    w_left, w_right = max(0, w_left), max(0, w_right)

    if (h_top, h_bottom, w_left, w_right) == (0, 0, 0, 0):
        return x

    N, C, H, W = x.shape
    H_out = H + h_top + h_bottom
    W_out = W + w_left + w_right
    itemsize = jnp.dtype(x.dtype).itemsize

    # Escape hatch: tiny tensors lose to XLA's fused pad.
    if x.size * itemsize < min_pallas_bytes:
        return jnp.pad(
            x, ((0, 0), (0, 0), (h_top, h_bottom), (w_left, w_right)),
            mode="constant", constant_values=value)

    NC = N * C
    tile_budget, vmem_limit, num_tc = _tpu_params()
    # Sub-32-bit dtypes pack along sublanes: real sublane tile is 8/16/32 rows.
    sub = max(8, 32 // itemsize)
    concat_ok = _unaligned_concat_supported()

    # --- layout & block sizing --------------------------------------------
    use_flat = (w_left == 0 and w_right == 0)
    if use_flat:
        L_in, L_out = H * W, H_out * W
        in_plane = _round_up(L_in, 128) * itemsize
        out_plane = _round_up(L_out, 128) * itemsize
        cb_budget = tile_budget // (in_plane + out_plane)
        # Block sublane dim must be a multiple of the dtype tile or cover NC.
        if cb_budget < 1 or (NC > cb_budget and cb_budget < sub):
            use_flat = False

    if use_flat:
        cb = min(cb_budget, NC)
        if num_tc > 1 and NC >= 4 * num_tc:
            # >=2 steady-state steps per TensorCore on v7x.
            cb = min(cb, max(1, NC // (2 * num_tc)))
        if cb < NC:
            cb = min(NC, max(sub, (cb // sub) * sub))
        grid = (pl.cdiv(NC, cb),)
        x_in = x.reshape(NC, L_in)
        out_shape = jax.ShapeDtypeStruct((NC, L_out), x.dtype)
        block_in, block_out = (cb, L_in), (cb, L_out)
        index_map = lambda i: (i, 0)
        kern = _padflat_concat_kernel if concat_ok else _padflat_multistore_kernel
        kernel = functools.partial(
            kern, pad_lo=h_top * W, pad_hi=h_bottom * W, value=value)
        in_tile_bytes = cb * in_plane
    else:
        in_plane = _round_up(H, sub) * _round_up(W, 128) * itemsize
        out_plane = _round_up(H_out, sub) * _round_up(W_out, 128) * itemsize
        cb = max(1, tile_budget // (in_plane + out_plane))
        cb = min(cb, NC)
        if num_tc > 1 and NC >= 4 * num_tc:
            cb = min(cb, max(1, NC // (2 * num_tc)))
        grid = (pl.cdiv(NC, cb),)
        x_in = x.reshape(NC, H, W)
        out_shape = jax.ShapeDtypeStruct((NC, H_out, W_out), x.dtype)
        block_in, block_out = (cb, H, W), (cb, H_out, W_out)
        index_map = lambda i: (i, 0, 0)
        kern = _pad3d_concat_kernel if concat_ok else _pad3d_multistore_kernel
        kernel = functools.partial(
            kern, h_top=h_top, h_bottom=h_bottom,
            w_left=w_left, w_right=w_right, value=value)
        in_tile_bytes = cb * in_plane

    # A pure copy kernel has no compute to hide DMA latency; with many short
    # steps, request a third in-flight input buffer.
    in_spec = pl.BlockSpec(block_in, index_map)
    if grid[0] >= 8 and in_tile_bytes < (1 << 20):
        try:
            in_spec = pl.BlockSpec(block_in, index_map, pipeline_mode=pl.Buffered(3))
        except Exception:
            in_spec = pl.BlockSpec(block_in, index_map)

    out = pl.pallas_call(
        kernel,
        out_shape=out_shape,
        grid_spec=pltpu.PrefetchScalarGridSpec(
            num_scalar_prefetch=0,
            grid=grid,
            in_specs=[in_spec],
            out_specs=pl.BlockSpec(block_out, index_map),
        ),
        compiler_params=pltpu.CompilerParams(
            dimension_semantics=("parallel",),
            vmem_limit_bytes=vmem_limit,
        ),
    )(x_in)

    if use_flat:
        return out.reshape(N, C, H_out, W)
    return out.reshape(N, C, H_out, W_out)


if __name__ == "__main__":
    key = jax.random.PRNGKey(0)

    # Small NCHW input consistent with a conv feature map.
    N, C, H, W = 2, 4, 16, 16
    x = jax.random.normal(key, (N, C, H, W), dtype=jnp.float32)

    # 1) Asymmetric W+H padding (3-D path: lane + sublane construction).
    out = jax.block_until_ready(padding_layer(x, (1, 2, 0, 1), min_pallas_bytes=0))
    ref = jnp.pad(x, ((0, 0), (0, 0), (0, 1), (1, 2)), mode="constant")
    assert out.shape == ref.shape and jnp.array_equal(out, ref), "case 1 mismatch"

    # 2) Mixed negative/positive padding (torch crop semantics).
    out2 = jax.block_until_ready(padding_layer(x, (-1, 2, 1, 0), min_pallas_bytes=0))
    ref2 = jnp.pad(x[:, :, :, 1:], ((0, 0), (0, 0), (1, 0), (0, 2)), mode="constant")
    assert jnp.array_equal(out2, ref2), "case 2 mismatch"

    # 3) H-only padding -> flattened lane-dense path.
    out3 = jax.block_until_ready(padding_layer(x, (0, 0, 2, 1), min_pallas_bytes=0))
    ref3 = jnp.pad(x, ((0, 0), (0, 0), (2, 1), (0, 0)), mode="constant")
    assert jnp.array_equal(out3, ref3), "case 3 mismatch"

    # 4) 2-entry padding (W only) with a non-zero constant value.
    out4 = jax.block_until_ready(
        padding_layer(x, (3, 1), value=1.5, min_pallas_bytes=0))
    ref4 = jnp.pad(x, ((0, 0), (0, 0), (0, 0), (3, 1)), mode="constant",
                   constant_values=1.5)
    assert jnp.array_equal(out4, ref4), "case 4 mismatch"

    print("KERNEL_OK")
</pallas_src>

<mosaic_0001>
module attributes {stable_mosaic.version = 11 : i64} {
  func.func @probe(%arg0: memref<2x5x9xf32, #tpu.memory_space<vmem>>, %arg1: memref<2x8x14xf32, #tpu.memory_space<vmem>>) attributes {dimension_semantics = [], scalar_prefetch = 0 : i64, scratch_operands = 0 : i64, tpu.core_type = #tpu.core_type<tc>} {
    %c0 = arith.constant 0 : index
    %c0_0 = arith.constant 0 : index
    %c0_1 = arith.constant 0 : index
    %0 = vector.load %arg0[%c0, %c0_0, %c0_1] : memref<2x5x9xf32, #tpu.memory_space<vmem>>, vector<2x5x9xf32>
    %cst = arith.constant 1.000000e+00 : f32
    %1 = vector.broadcast %cst : f32 to vector<2x5x3xf32>
    %cst_2 = arith.constant 2.000000e+00 : f32
    %2 = vector.broadcast %cst_2 : f32 to vector<2x5x2xf32>
    %3 = tpu.concatenate %1, %0, %2 in 2 : vector<2x5x3xf32>, vector<2x5x9xf32>, vector<2x5x2xf32> -> vector<2x5x14xf32>
    %cst_3 = arith.constant 3.000000e+00 : f32
    %4 = vector.broadcast %cst_3 : f32 to vector<2x3x14xf32>
    %5 = tpu.concatenate %3, %4 in 1 : vector<2x5x14xf32>, vector<2x3x14xf32> -> vector<2x8x14xf32>
    %c0_4 = arith.constant 0 : index
    %c0_5 = arith.constant 0 : index
    %c0_6 = arith.constant 0 : index
    %6 = vector.load %arg1[%c0_4, %c0_5, %c0_6] : memref<2x8x14xf32, #tpu.memory_space<vmem>>, vector<2x8x14xf32>
    tpu.vector_store %arg1[%c0_4, %c0_5, %c0_6], %5 {strides = array<i32>} : memref<2x8x14xf32, #tpu.memory_space<vmem>>, vector<2x8x14xf32>,
    return
  }
}

module attributes {stable_mosaic.version = 11 : i64} {
  func.func @_pad3d_multistore_kernel(%arg0: i32, %arg1: memref<8x16x16xf32, #tpu.memory_space<vmem>>, %arg2: memref<8x17x19xf32, #tpu.memory_space<vmem>>) attributes {dimension_semantics = [#tpu.dimension_semantics<parallel>], iteration_bounds = array<i64: 1>, scalar_prefetch = 0 : i64, scratch_operands = 0 : i64, tpu.core_type = #tpu.core_type<tc>, window_params = [{transform_indices = @transform_0, window_bounds = array<i64: 8, 16, 16>}, {transform_indices = @transform_1, window_bounds = array<i64: 8, 17, 19>}]} {
    %cst = arith.constant 0.000000e+00 : f32
    %0 = vector.broadcast %cst : f32 to vector<8x1x19xf32>
    %c0 = arith.constant 0 : index
    %c16 = arith.constant 16 : index
    %c0_0 = arith.constant 0 : index
    %1 = vector.load %arg2[%c0, %c16, %c0_0] : memref<8x17x19xf32, #tpu.memory_space<vmem>>, vector<8x1x19xf32>
    tpu.vector_store %arg2[%c0, %c16, %c0_0], %0 {strides = array<i32>} : memref<8x17x19xf32, #tpu.memory_space<vmem>>, vector<8x1x19xf32>,
    %cst_1 = arith.constant 0.000000e+00 : f32
    %2 = vector.broadcast %cst_1 : f32 to vector<8x16x1xf32>
    %c0_2 = arith.constant 0 : index
    %c0_3 = arith.constant 0 : index
    %c0_4 = arith.constant 0 : index
    %3 = vector.load %arg2[%c0_2, %c0_3, %c0_4] : memref<8x17x19xf32, #tpu.memory_space<vmem>>, vector<8x16x1xf32>
    tpu.vector_store %arg2[%c0_2, %c0_3, %c0_4], %2 {strides = array<i32>} : memref<8x17x19xf32, #tpu.memory_space<vmem>>, vector<8x16x1xf32>,
    %cst_5 = arith.constant 0.000000e+00 : f32
    %4 = vector.broadcast %cst_5 : f32 to vector<8x16x2xf32>
    %c0_6 = arith.constant 0 : index
    %c0_7 = arith.constant 0 : index
    %c17 = arith.constant 17 : index
    %5 = vector.load %arg2[%c0_6, %c0_7, %c17] : memref<8x17x19xf32, #tpu.memory_space<vmem>>, vector<8x16x2xf32>
    tpu.vector_store %arg2[%c0_6, %c0_7, %c17], %4 {strides = array<i32>} : memref<8x17x19xf32, #tpu.memory_space<vmem>>, vector<8x16x2xf32>,
    %c0_8 = arith.constant 0 : index
    %c0_9 = arith.constant 0 : index
    %c0_10 = arith.constant 0 : index
    %6 = vector.load %arg1[%c0_8, %c0_9, %c0_10] : memref<8x16x16xf32, #tpu.memory_space<vmem>>, vector<8x16x16xf32>
    %c0_11 = arith.constant 0 : index
    %c0_12 = arith.constant 0 : index
    %c1 = arith.constant 1 : index
    %7 = vector.load %arg2[%c0_11, %c0_12, %c1] : memref<8x17x19xf32, #tpu.memory_space<vmem>>, vector<8x16x16xf32>
    tpu.vector_store %arg2[%c0_11, %c0_12, %c1], %6 {strides = array<i32>} : memref<8x17x19xf32, #tpu.memory_space<vmem>>, vector<8x16x16xf32>,
    return
  }
  func.func @transform_0(%arg0: i32) -> (i32, i32, i32) {
    %c0_i32 = arith.constant 0 : i32
    %c0_i32_0 = arith.constant 0 : i32
    %c0_i32_1 = arith.constant 0 : i32
    return %arg0, %c0_i32, %c0_i32_0 : i32, i32, i32
  }
  func.func @transform_1(%arg0: i32) -> (i32, i32, i32) {
    %c0_i32 = arith.constant 0 : i32
    %c0_i32_0 = arith.constant 0 : i32
    %c0_i32_1 = arith.constant 0 : i32
    return %arg0, %c0_i32, %c0_i32_0 : i32, i32, i32
  }
}

</mosaic_0001>

<llo_original>
// kernel: tpu_custom_call.1
$region0: #{tpu_custom_call.1}
  #allocation0 [shape = 'u32[]', space=smem, size = 0x4, offset = 0x4, fixed_abs, tag = 'smem constant byte address 0x4 - core index']
  #allocation1 [shape = 'u32[72,128]{1,0:T(1,128)}', space=vmem, size = 0x9000, scoped, tag = 'internal scratch']
  %s0 = inlined_call_operand.vmem [shape: f32[2,5,9], index: 0, kind: input, shape index: {}]
  %s1 = inlined_call_operand.hbm [shape: f32[2,8,14], index: 1, kind: output, shape index: {}]
  %s2 = sld [smem:[#allocation0]]
  $region14: #{tpu_custom_call.1} parent=0
    _
  %s4 = ssub.s32 1, %s2
  %s5 = scalar_select 0, %s4, %s2
  $region1: #{tpu_custom_call.1} parent=0
    #allocation2 [shape = 'u8[8192]{0}', space=vmem, size = 0x2000, scoped, tag = 'output window, operand 0, single buffered']
    #allocation3 [shape = 's32[1]{0}', space=sflag, size = 0x4, scoped, tag = 'scoped memory for tpu_custom_call.1']
    %6 = vsyncpa [#allocation3], 0
    // Predicated region
    $region2: #{tpu_custom_call.1} parent=1 // pred_check
      _
    $region3: #{tpu_custom_call.1} parent=1 // pred_check_branch
      %8 = sbr.rel (0) target = $region5
    $region4: #{tpu_custom_call.1} parent=1 // pred_region
      _
    $region5: #{tpu_custom_call.1} parent=1 // pred_fallthru
      _
    %v9 = vld [vmem:[%s0] sm:$0x1f]
    %v10 = vld [vmem:[%s0 + $0x8] sm:$0x1f]
    %13 = vrot.lane.b32.xlu0 %v9, 3
    %v14 = vpop.permute.xlu0 %13
    %15 = vrot.lane.b32.xlu0 %v10, 3
    %v16 = vpop.permute.xlu0 %15
    %vm19 = vcmask 23552
    %v20 = vsel %vm19, 1.0, %v14
    %v21 = vsel %vm19, 1.0, %v16
    %vm22 = vcmask 97280
    %v23 = vsel %vm22, %v20, 2.0
    %v24 = vsel %vm22, %v21, 2.0
    %vm25 = vcmask 1044480
    %v26 = vsel %vm25, %v23, 3.0
    %v27 = vsel %vm25, %v24, 3.0
    %vm28 = vcmask 113664
    %29 = vst.msk [vmem:[#allocation2] sm:$0xff] %vm28, %v26
    %30 = vst.msk [vmem:[#allocation2 + $0x8] sm:$0xff] %vm28, %v27
    // Predicated region
    $region6: #{tpu_custom_call.1} parent=1 // pred_check
      _
    $region7: #{tpu_custom_call.1} parent=1 // pred_check_branch
      %32 = sbr.rel (0) target = $region9
    $region8: #{tpu_custom_call.1} parent=1 // pred_region
      %34 = vsyncadd [#allocation3], 0
      %s35 = sshll.u32 [#allocation2], 4
      %s36 = int_to_ptr.vmem [resolvable:$true] %s35
      %s37 = sshll.u32 %s1, 4
      %s38 = int_to_ptr.hbm [resolvable:$true] %s37
      %43 = dma.vmem_to_hbm [thread:$0]  %s36, 256, %s38, [#allocation3], 128, 128, 8
    $region9: #{tpu_custom_call.1} parent=1 // pred_fallthru
      _
    // Predicated region
    $region10: #{tpu_custom_call.1} parent=1 // pred_check
      _
    $region11: #{tpu_custom_call.1} parent=1 // pred_check_branch
      %45 = sbr.rel (0) target = $region13
    $region12: #{tpu_custom_call.1} parent=1 // pred_region
      %47 = dma.done [#allocation3], 256
    $region13: #{tpu_custom_call.1} parent=1 // pred_fallthru
      _
    %48 = vsyncpa [#allocation3], 1

// kernel: tpu_custom_call.1
$region0: #{tpu_custom_call.1}
  #allocation0 [shape = 'u32[]', space=smem, size = 0x4, offset = 0x4, fixed_abs, tag = 'smem constant byte address 0x4 - core index']
  #allocation1 [shape = 'u32[72,128]{1,0:T(1,128)}', space=vmem, size = 0x9000, scoped, tag = 'internal scratch']
  %s0 = inlined_call_operand.hbm [shape: f32[8,16,16], index: 0, kind: input, shape index: {}]
  %s1 = inlined_call_operand.vmem [shape: f32[8,17,19], index: 1, kind: output, shape index: {}]
  %s2 = sld [smem:[#allocation0]]
  $region18: #{tpu_custom_call.1} parent=0
    _
  %s4 = ssub.s32 1, %s2
  %s5 = scalar_select 0, %s4, %s2
  $region1: #{tpu_custom_call.1} parent=0
    #allocation2 [shape = 'u8[65536]{0}', space=vmem, size = 0x10000, scoped, tag = 'input window, operand 0, single buffered']
    #allocation3 [shape = 's32[1]{0}', space=sflag, size = 0x4, scoped, tag = 'scoped memory for tpu_custom_call.1']
    %6 = vsyncpa [#allocation3], 0
    // Predicated region
    $region2: #{tpu_custom_call.1} parent=1 // pred_check
      _
    $region3: #{tpu_custom_call.1} parent=1 // pred_check_branch
      %8 = sbr.rel (0) target = $region5
    $region4: #{tpu_custom_call.1} parent=1 // pred_region
      %10 = vsyncadd [#allocation3], 0
      %s11 = sshll.u32 %s0, 4
      %s12 = int_to_ptr.hbm [resolvable:$true] %s11
      %s13 = sshll.u32 [#allocation2], 4
      %s14 = int_to_ptr.vmem [resolvable:$true] %s13
      %19 = dma.hbm_to_vmem [thread:$0]  %s12, 2048, %s14, [#allocation3], 128, 128, 8
    $region5: #{tpu_custom_call.1} parent=1 // pred_fallthru
      _
    // Predicated region
    $region6: #{tpu_custom_call.1} parent=1 // pred_check
      _
    $region7: #{tpu_custom_call.1} parent=1 // pred_check_branch
      %21 = sbr.rel (0) target = $region9
    $region8: #{tpu_custom_call.1} parent=1 // pred_region
      %23 = dma.done [#allocation3], 2048
    $region9: #{tpu_custom_call.1} parent=1 // pred_fallthru
      _
    %vm24 = vcmask 147456
    %25 = vst.msk [vmem:[%s1 + $0x10] sm:$0x1] %vm24, 0.0
    %26 = vst.msk [vmem:[%s1 + $0x28] sm:$0x1] %vm24, 0.0
    %27 = vst.msk [vmem:[%s1 + $0x40] sm:$0x1] %vm24, 0.0
    %28 = vst.msk [vmem:[%s1 + $0x58] sm:$0x1] %vm24, 0.0
    %29 = vst.msk [vmem:[%s1 + $0x70] sm:$0x1] %vm24, 0.0
    %30 = vst.msk [vmem:[%s1 + $0x88] sm:$0x1] %vm24, 0.0
    %31 = vst.msk [vmem:[%s1 + $0xa0] sm:$0x1] %vm24, 0.0
    %32 = vst.msk [vmem:[%s1 + $0xb8] sm:$0x1] %vm24, 0.0
    %vm33 = vcmask 7168
    %34 = vst.msk [vmem:[%s1] sm:$0xff] %vm33, 0.0
    %35 = vst.msk [vmem:[%s1 + $0x8] sm:$0xff] %vm33, 0.0
    %36 = vst.msk [vmem:[%s1 + $0x18] sm:$0xff] %vm33, 0.0
    %37 = vst.msk [vmem:[%s1 + $0x20] sm:$0xff] %vm33, 0.0
    %38 = vst.msk [vmem:[%s1 + $0x30] sm:$0xff] %vm33, 0.0
    %39 = vst.msk [vmem:[%s1 + $0x38] sm:$0xff] %vm33, 0.0
    %40 = vst.msk [vmem:[%s1 + $0x48] sm:$0xff] %vm33, 0.0
    %41 = vst.msk [vmem:[%s1 + $0x50] sm:$0xff] %vm33, 0.0
    %42 = vst.msk [vmem:[%s1 + $0x60] sm:$0xff] %vm33, 0.0
    %43 = vst.msk [vmem:[%s1 + $0x68] sm:$0xff] %vm33, 0.0
    %44 = vst.msk [vmem:[%s1 + $0x78] sm:$0xff] %vm33, 0.0
    %45 = vst.msk [vmem:[%s1 + $0x80] sm:$0xff] %vm33, 0.0
    %46 = vst.msk [vmem:[%s1 + $0x90] sm:$0xff] %vm33, 0.0
    %47 = vst.msk [vmem:[%s1 + $0x98] sm:$0xff] %vm33, 0.0
    %48 = vst.msk [vmem:[%s1 + $0xa8] sm:$0xff] %vm33, 0.0
    %49 = vst.msk [vmem:[%s1 + $0xb0] sm:$0xff] %vm33, 0.0
    %vm50 = vcmask 154760
    %51 = vst.msk [vmem:[%s1] sm:$0xff] %vm50, 0.0
    %52 = vst.msk [vmem:[%s1 + $0x8] sm:$0xff] %vm50, 0.0
    %53 = vst.msk [vmem:[%s1 + $0x18] sm:$0xff] %vm50, 0.0
    %54 = vst.msk [vmem:[%s1 + $0x20] sm:$0xff] %vm50, 0.0
    %55 = vst.msk [vmem:[%s1 + $0x30] sm:$0xff] %vm50, 0.0
    %56 = vst.msk [vmem:[%s1 + $0x38] sm:$0xff] %vm50, 0.0
    %57 = vst.msk [vmem:[%s1 + $0x48] sm:$0xff] %vm50, 0.0
    %58 = vst.msk [vmem:[%s1 + $0x50] sm:$0xff] %vm50, 0.0
    %59 = vst.msk [vmem:[%s1 + $0x60] sm:$0xff] %vm50, 0.0
    %60 = vst.msk [vmem:[%s1 + $0x68] sm:$0xff] %vm50, 0.0
    %61 = vst.msk [vmem:[%s1 + $0x78] sm:$0xff] %vm50, 0.0
    %62 = vst.msk [vmem:[%s1 + $0x80] sm:$0xff] %vm50, 0.0
    %63 = vst.msk [vmem:[%s1 + $0x90] sm:$0xff] %vm50, 0.0
    %64 = vst.msk [vmem:[%s1 + $0x98] sm:$0xff] %vm50, 0.0
    %65 = vst.msk [vmem:[%s1 + $0xa8] sm:$0xff] %vm50, 0.0
    %66 = vst.msk [vmem:[%s1 + $0xb0] sm:$0xff] %vm50, 0.0
    %v67 = vld [vmem:[#allocation2] sm:$0xff]
    %v68 = vld [vmem:[#allocation2 + $0x8] sm:$0xff]
    %v69 = vld [vmem:[#allocation2 + $0x10] sm:$0xff]
    %v70 = vld [vmem:[#allocation2 + $0x18] sm:$0xff]
    %v71 = vld [vmem:[#allocation2 + $0x20] sm:$0xff]
    %v72 = vld [vmem:[#allocation2 + $0x28] sm:$0xff]
    %v73 = vld [vmem:[#allocation2 + $0x30] sm:$0xff]
    %v74 = vld [vmem:[#allocation2 + $0x38] sm:$0xff]
    %v75 = vld [vmem:[#allocation2 + $0x40] sm:$0xff]
    %v76 = vld [vmem:[#allocation2 + $0x48] sm:$0xff]
    %v77 = vld [vmem:[#allocation2 + $0x50] sm:$0xff]
    %v78 = vld [vmem:[#allocation2 + $0x58] sm:$0xff]
    %v79 = vld [vmem:[#allocation2 + $0x60] sm:$0xff]
    %v80 = vld [vmem:[#allocation2 + $0x68] sm:$0xff]
    %v81 = vld [vmem:[#allocation2 + $0x70] sm:$0xff]
    %v82 = vld [vmem:[#allocation2 + $0x78] sm:$0xff]
    %99 = vrot.lane.b32.xlu0 %v67, 1
    %v100 = vpop.permute.xlu0 %99
    %101 = vrot.lane.b32.xlu0 %v68, 1
    %v102 = vpop.permute.xlu0 %101
    %103 = vrot.lane.b32.xlu0 %v69, 1
    %v104 = vpop.permute.xlu0 %103
    %105 = vrot.lane.b32.xlu0 %v70, 1
    %v106 = vpop.permute.xlu0 %105
    %107 = vrot.lane.b32.xlu0 %v71, 1
    %v108 = vpop.permute.xlu0 %107
    %109 = vrot.lane.b32.xlu0 %v72, 1
    %v110 = vpop.permute.xlu0 %109
    %111 = vrot.lane.b32.xlu0 %v73, 1
    %v112 = vpop.permute.xlu0 %111
    %113 = vrot.lane.b32.xlu0 %v74, 1
    %v114 = vpop.permute.xlu0 %113
    %115 = vrot.lane.b32.xlu0 %v75, 1
    %v116 = vpop.permute.xlu0 %115
    %117 = vrot.lane.b32.xlu0 %v76, 1
    %v118 = vpop.permute.xlu0 %117
    %119 = vrot.lane.b32.xlu0 %v77, 1
    %v120 = vpop.permute.xlu0 %119
    %121 = vrot.lane.b32.xlu0 %v78, 1
    %v122 = vpop.permute.xlu0 %121
    %123 = vrot.lane.b32.xlu0 %v79, 1
    %v124 = vpop.permute.xlu0 %123
    %125 = vrot.lane.b32.xlu0 %v80, 1
    %v126 = vpop.permute.xlu0 %125
    %127 = vrot.lane.b32.xlu0 %v81, 1
    %v128 = vpop.permute.xlu0 %127
    %129 = vrot.lane.b32.xlu0 %v82, 1
    %v130 = vpop.permute.xlu0 %129
    %vm147 = vcmask 138248
    %148 = vst.msk [vmem:[%s1] sm:$0xff] %vm147, %v100
    %149 = vst.msk [vmem:[%s1 + $0x8] sm:$0xff] %vm147, %v102
    %150 = vst.msk [vmem:[%s1 + $0x18] sm:$0xff] %vm147, %v104
    %151 = vst.msk [vmem:[%s1 + $0x20] sm:$0xff] %vm147, %v106
    %152 = vst.msk [vmem:[%s1 + $0x30] sm:$0xff] %vm147, %v108
    %153 = vst.msk [vmem:[%s1 + $0x38] sm:$0xff] %vm147, %v110
    %154 = vst.msk [vmem:[%s1 + $0x48] sm:$0xff] %vm147, %v112
    %155 = vst.msk [vmem:[%s1 + $0x50] sm:$0xff] %vm147, %v114
    %156 = vst.msk [vmem:[%s1 + $0x60] sm:$0xff] %vm147, %v116
    %157 = vst.msk [vmem:[%s1 + $0x68] sm:$0xff] %vm147, %v118
    %158 = vst.msk [vmem:[%s1 + $0x78] sm:$0xff] %vm147, %v120
    %159 = vst.msk [vmem:[%s1 + $0x80] sm:$0xff] %vm147, %v122
    %160 = vst.msk [vmem:[%s1 + $0x90] sm:$0xff] %vm147, %v124
    %161 = vst.msk [vmem:[%s1 + $0x98] sm:$0xff] %vm147, %v126
    %162 = vst.msk [vmem:[%s1 + $0xa8] sm:$0xff] %vm147, %v128
    %163 = vst.msk [vmem:[%s1 + $0xb0] sm:$0xff] %vm147, %v130
    // Predicated region
    $region10: #{tpu_custom_call.1} parent=1 // pred_check
      _
    $region11: #{tpu_custom_call.1} parent=1 // pred_check_branch
      %165 = sbr.rel (0) target = $region13
    $region12: #{tpu_custom_call.1} parent=1 // pred_region
      _
    $region13: #{tpu_custom_call.1} parent=1 // pred_fallthru
      _
    // Predicated region
    $region14: #{tpu_custom_call.1} parent=1 // pred_check
      _
    $region15: #{tpu_custom_call.1} parent=1 // pred_check_branch
      %167 = sbr.rel (0) target = $region17
    $region16: #{tpu_custom_call.1} parent=1 // pred_region
      _
    $region17: #{tpu_custom_call.1} parent=1 // pred_fallthru
      _
    %168 = vsyncpa [#allocation3], 1

</llo_original>
